<compile_context>
chip_gen: v6e
topology: v6e:2x2x1
jax: 0.10.0
libtpu: 0.0.40
codegen_flags: <defaults>
</compile_context>

<pallas_src>
import jax
import jax.numpy as jnp
from jax.experimental import pallas as pl
from jax.experimental.pallas import tpu as pltpu

BN_EPS = 1e-5


# ------------------------------- helpers ----------------------------------- #

def _round_up(x, m):
    return (x + m - 1) // m * m


# ----------------------------- Pallas kernel ------------------------------- #

def _make_fused_mlp_kernel(num_layers, n_real, n_pad, f_pad):
    """Fused MLP kernel. One grid step per layer; h lives in VMEM scratch.

    Refs:
      x_ref  : [n_pad, f_pad]        padded input (read only at layer 0)
      w_ref  : [1, f_pad, f_pad]     this layer's weight, already [in, out]
      p_ref  : [1, 3, f_pad]         rows: bias / gamma / beta (padded)
      o_ref  : [n_pad, f_pad]        padded output (written only at last layer)
      h_ref  : [n_pad, f_pad]        VMEM scratch carrying the activation
    """
    last = num_layers - 1
    inv_n = 1.0 / float(n_real)

    def kernel(x_ref, w_ref, p_ref, o_ref, h_ref):
        layer = pl.program_id(0)

        @pl.when(layer == 0)
        def _():
            h_ref[...] = x_ref[...]

        w = w_ref[0]                       # [f_pad, f_pad]  (pre-transposed)
        p = p_ref[0]                       # [3, f_pad]
        bias = p[0:1, :]                   # [1, f_pad]

        # MXU matmul, f32 accumulation.
        h = jnp.dot(h_ref[...], w, preferred_element_type=jnp.float32) + bias

        @pl.when(layer < last)
        def _():
            gamma = p[1:2, :]
            beta = p[2:3, :]
            # Mask padded batch rows out of the statistics (static no-op when
            # n_pad == n_real).
            if n_pad > n_real:
                rows = jax.lax.broadcasted_iota(jnp.int32, (n_pad, f_pad), 0)
                hm = jnp.where(rows < n_real, h, 0.0)
            else:
                hm = h
            # Single pass: sum and sum-of-squares -> mean / biased variance.
            s = jnp.sum(hm, axis=0, keepdims=True)
            ss = jnp.sum(hm * hm, axis=0, keepdims=True)
            mean = s * inv_n
            var = jnp.maximum(ss * inv_n - mean * mean, 0.0)
            h_hat = (h - mean) * jax.lax.rsqrt(var + BN_EPS)
            h_ref[...] = jnp.maximum(h_hat * gamma + beta, 0.0)

        @pl.when(layer == last)
        def _():
            o_ref[...] = h

    return kernel


# ------------------------------ JAX wrapper -------------------------------- #

def mlp_forward(x, linears, batch_norms, num_layers):
    """Run the fused MLP kernel. linears[i] = (W [out,in], b [out]),
    batch_norms[i] = (gamma [hidden], beta [hidden])."""
    if num_layers < 1:
        raise ValueError("number of layers should be positive!")

    n_real, input_dim = x.shape
    out_dim = linears[-1][0].shape[0]

    # Common padded feature width (multiple of 128) covering every layer dim.
    dims = [input_dim] + [w.shape[0] for (w, _) in linears]
    f_pad = _round_up(max(dims), 128)
    n_pad = _round_up(n_real, 8)
    n_layers = num_layers

    # Stack + pad parameters (host-side layout plumbing, done once).
    w_stack = jnp.zeros((n_layers, f_pad, f_pad), jnp.float32)
    p_stack = jnp.zeros((n_layers, 3, f_pad), jnp.float32)
    p_stack = p_stack.at[:, 1, :].set(1.0)          # gamma defaults to 1
    for l, (w, b) in enumerate(linears):
        dout, din = w.shape
        w_stack = w_stack.at[l, :din, :dout].set(w.T)   # pre-transpose -> [in, out]
        p_stack = p_stack.at[l, 0, :dout].set(b)
    for l, (gamma, beta) in enumerate(batch_norms):
        d = gamma.shape[0]
        p_stack = p_stack.at[l, 1, :d].set(gamma)
        p_stack = p_stack.at[l, 2, :d].set(beta)

    x_pad = jnp.zeros((n_pad, f_pad), jnp.float32).at[:n_real, :input_dim].set(x)

    kernel = _make_fused_mlp_kernel(num_layers, n_real, n_pad, f_pad)

    out_pad = pl.pallas_call(
        kernel,
        out_shape=jax.ShapeDtypeStruct((n_pad, f_pad), jnp.float32),
        grid_spec=pltpu.PrefetchScalarGridSpec(
            num_scalar_prefetch=0,
            grid=(n_layers,),
            in_specs=[
                # x stays resident (constant block index -> fetched once).
                pl.BlockSpec((n_pad, f_pad), lambda l: (0, 0)),
                # per-layer weight / params blocks, double-buffered by Pallas.
                pl.BlockSpec((1, f_pad, f_pad), lambda l: (l, 0, 0)),
                pl.BlockSpec((1, 3, f_pad), lambda l: (l, 0, 0)),
            ],
            out_specs=pl.BlockSpec((n_pad, f_pad), lambda l: (0, 0)),
            scratch_shapes=[pltpu.VMEM((n_pad, f_pad), jnp.float32)],
        ),
        compiler_params=pltpu.CompilerParams(
            dimension_semantics=("arbitrary",),   # layer loop carries state
        ),
    )(x_pad, w_stack, p_stack)

    return out_pad[:n_real, :out_dim]


# --------------------------- Parameter construction ------------------------ #

def init_mlp_params(key, num_layers, input_dim, hidden_dim, output_dim):
    """Mimic nn.Linear default init (U(-1/sqrt(in), 1/sqrt(in))) and
    nn.BatchNorm1d defaults (gamma=1, beta=0)."""
    if num_layers < 1:
        raise ValueError("number of layers should be positive!")

    if num_layers == 1:
        dims = [(input_dim, output_dim)]
    else:
        dims = [(input_dim, hidden_dim)]
        dims += [(hidden_dim, hidden_dim)] * (num_layers - 2)
        dims += [(hidden_dim, output_dim)]

    linears = []
    for (din, dout) in dims:
        key, kw, kb = jax.random.split(key, 3)
        bound = 1.0 / jnp.sqrt(float(din))
        w = jax.random.uniform(kw, (dout, din), jnp.float32, -bound, bound)
        b = jax.random.uniform(kb, (dout,), jnp.float32, -bound, bound)
        linears.append((w, b))

    batch_norms = []
    for _ in range(max(num_layers - 1, 0)):
        batch_norms.append((jnp.ones((hidden_dim,), jnp.float32),
                            jnp.zeros((hidden_dim,), jnp.float32)))
    return linears, batch_norms


# Pure-JAX reference for the correctness check.
def mlp_reference(x, linears, batch_norms, num_layers):
    if num_layers == 1:
        w, b = linears[0]
        return x @ w.T + b
    h = x
    for i in range(num_layers - 1):
        w, b = linears[i]
        gamma, beta = batch_norms[i]
        h = h @ w.T + b
        mean = jnp.mean(h, axis=0, keepdims=True)
        var = jnp.mean((h - mean) ** 2, axis=0, keepdims=True)
        h = (h - mean) * jax.lax.rsqrt(var + BN_EPS) * gamma + beta
        h = jnp.maximum(h, 0.0)
    w, b = linears[-1]
    return h @ w.T + b


if __name__ == "__main__":
    # Small shapes consistent with the module's forward: x is [batch, input_dim].
    num_layers, input_dim, hidden_dim, output_dim = 3, 16, 32, 8
    batch = 8

    key = jax.random.PRNGKey(0)
    key, kx = jax.random.split(key)
    x = jax.random.normal(kx, (batch, input_dim), jnp.float32)

    linears, batch_norms = init_mlp_params(
        key, num_layers, input_dim, hidden_dim, output_dim)

    out = mlp_forward(x, linears, batch_norms, num_layers)
    out = jax.block_until_ready(out)

    ref = mlp_reference(x, linears, batch_norms, num_layers)
    assert out.shape == (batch, output_dim)
    assert jnp.allclose(out, ref, atol=1e-3, rtol=1e-3), (
        float(jnp.max(jnp.abs(out - ref))))

    print("KERNEL_OK")
</pallas_src>

<mosaic_0001>
module attributes {stable_mosaic.version = 11 : i64} {
  func.func @kernel(%arg0: i32, %arg1: memref<8x128xf32, #tpu.memory_space<vmem>>, %arg2: memref<1x128x128xf32, #tpu.memory_space<vmem>>, %arg3: memref<1x3x128xf32, #tpu.memory_space<vmem>>, %arg4: memref<8x128xf32, #tpu.memory_space<vmem>>, %arg5: memref<8x128xf32, #tpu.memory_space<vmem>>) attributes {dimension_semantics = [#tpu.dimension_semantics<arbitrary>], iteration_bounds = array<i64: 3>, scalar_prefetch = 0 : i64, scratch_operands = 1 : i64, tpu.core_type = #tpu.core_type<tc>, window_params = [{pipeline_mode = #tpu.pipeline_mode<synchronous>, transform_indices = @transform_0, window_bounds = array<i64: 8, 128>}, {transform_indices = @transform_1, window_bounds = array<i64: 1, 128, 128>}, {transform_indices = @transform_2, window_bounds = array<i64: 1, 3, 128>}, {pipeline_mode = #tpu.pipeline_mode<synchronous>, transform_indices = @transform_3, window_bounds = array<i64: 8, 128>}]} {
    %c0_i32 = arith.constant 0 : i32
    %0 = arith.cmpi eq, %arg0, %c0_i32 : i32
    %1 = arith.extui %0 : i1 to i32
    %c0_i32_0 = arith.constant 0 : i32
    %2 = arith.cmpi ne, %1, %c0_i32_0 : i32
    scf.if %2 {
      %c0_11 = arith.constant 0 : index
      %c0_12 = arith.constant 0 : index
      %18 = vector.load %arg1[%c0_11, %c0_12] : memref<8x128xf32, #tpu.memory_space<vmem>>, vector<8x128xf32>
      %c0_13 = arith.constant 0 : index
      %c0_14 = arith.constant 0 : index
      %19 = vector.load %arg5[%c0_13, %c0_14] : memref<8x128xf32, #tpu.memory_space<vmem>>, vector<8x128xf32>
      tpu.vector_store %arg5[%c0_13, %c0_14], %18 {strides = array<i32>} : memref<8x128xf32, #tpu.memory_space<vmem>>, vector<8x128xf32>,
    } else {
    }
    %c0 = arith.constant 0 : index
    %c0_1 = arith.constant 0 : index
    %c0_2 = arith.constant 0 : index
    %3 = vector.load %arg2[%c0, %c0_1, %c0_2] : memref<1x128x128xf32, #tpu.memory_space<vmem>>, vector<1x128x128xf32>
    %4 = vector.shape_cast %3 : vector<1x128x128xf32> to vector<128x128xf32>
    %c0_3 = arith.constant 0 : index
    %c0_4 = arith.constant 0 : index
    %c0_5 = arith.constant 0 : index
    %5 = vector.load %arg3[%c0_3, %c0_4, %c0_5] : memref<1x3x128xf32, #tpu.memory_space<vmem>>, vector<1x3x128xf32>
    %6 = vector.shape_cast %5 : vector<1x3x128xf32> to vector<3x128xf32>
    %7 = vector.extract_strided_slice %6 {offsets = [0, 0], sizes = [1, 128], strides = [1, 1]} : vector<3x128xf32> to vector<1x128xf32>
    %c0_6 = arith.constant 0 : index
    %c0_7 = arith.constant 0 : index
    %8 = vector.load %arg5[%c0_6, %c0_7] : memref<8x128xf32, #tpu.memory_space<vmem>>, vector<8x128xf32>
    %cst = arith.constant dense<0.000000e+00> : vector<8x128xf32>
    %9 = tpu.matmul %8, %4, %cst {dimension_numbers = #tpu.dot_dimension_numbers<[1], [0], [0], [1], [0, 0, 1, 1], [], []>} : vector<8x128xf32>, vector<128x128xf32>, vector<8x128xf32> -> vector<8x128xf32>
    %10 = vector.broadcast %7 : vector<1x128xf32> to vector<8x128xf32>
    %11 = arith.addf %9, %10 : vector<8x128xf32>
    %c2_i32 = arith.constant 2 : i32
    %12 = arith.cmpi slt, %arg0, %c2_i32 : i32
    %13 = arith.extui %12 : i1 to i32
    %c0_i32_8 = arith.constant 0 : i32
    %14 = arith.cmpi ne, %13, %c0_i32_8 : i32
    scf.if %14 {
      %18 = vector.extract_strided_slice %6 {offsets = [1, 0], sizes = [1, 128], strides = [1, 1]} : vector<3x128xf32> to vector<1x128xf32>
      %19 = vector.extract_strided_slice %6 {offsets = [2, 0], sizes = [1, 128], strides = [1, 1]} : vector<3x128xf32> to vector<1x128xf32>
      %cst_11 = arith.constant dense<0.000000e+00> : vector<128xf32>
      %20 = vector.multi_reduction <add>, %11, %cst_11 [0] : vector<8x128xf32> to vector<128xf32>
      %21 = vector.shape_cast %20 : vector<128xf32> to vector<1x128xf32>
      %22 = arith.mulf %11, %11 : vector<8x128xf32>
      %cst_12 = arith.constant dense<0.000000e+00> : vector<128xf32>
      %23 = vector.multi_reduction <add>, %22, %cst_12 [0] : vector<8x128xf32> to vector<128xf32>
      %24 = vector.shape_cast %23 : vector<128xf32> to vector<1x128xf32>
      %cst_13 = arith.constant 1.250000e-01 : f32
      %25 = vector.broadcast %cst_13 : f32 to vector<1x128xf32>
      %26 = arith.mulf %21, %25 : vector<1x128xf32>
      %cst_14 = arith.constant 1.250000e-01 : f32
      %27 = vector.broadcast %cst_14 : f32 to vector<1x128xf32>
      %28 = arith.mulf %24, %27 : vector<1x128xf32>
      %29 = arith.mulf %26, %26 : vector<1x128xf32>
      %30 = arith.subf %28, %29 : vector<1x128xf32>
      %cst_15 = arith.constant 0.000000e+00 : f32
      %31 = vector.broadcast %cst_15 : f32 to vector<1x128xf32>
      %32 = arith.maximumf %30, %31 : vector<1x128xf32>
      %33 = vector.broadcast %26 : vector<1x128xf32> to vector<8x128xf32>
      %34 = arith.subf %11, %33 : vector<8x128xf32>
      %cst_16 = arith.constant 9.99999974E-6 : f32
      %35 = vector.broadcast %cst_16 : f32 to vector<1x128xf32>
      %36 = arith.addf %32, %35 : vector<1x128xf32>
      %37 = math.rsqrt %36 : vector<1x128xf32>
      %38 = vector.broadcast %37 : vector<1x128xf32> to vector<8x128xf32>
      %39 = arith.mulf %34, %38 : vector<8x128xf32>
      %40 = vector.broadcast %18 : vector<1x128xf32> to vector<8x128xf32>
      %41 = arith.mulf %39, %40 : vector<8x128xf32>
      %42 = vector.broadcast %19 : vector<1x128xf32> to vector<8x128xf32>
      %43 = arith.addf %41, %42 : vector<8x128xf32>
      %cst_17 = arith.constant 0.000000e+00 : f32
      %44 = vector.broadcast %cst_17 : f32 to vector<8x128xf32>
      %45 = arith.maximumf %43, %44 : vector<8x128xf32>
      %c0_18 = arith.constant 0 : index
      %c0_19 = arith.constant 0 : index
      %46 = vector.load %arg5[%c0_18, %c0_19] : memref<8x128xf32, #tpu.memory_space<vmem>>, vector<8x128xf32>
      tpu.vector_store %arg5[%c0_18, %c0_19], %45 {strides = array<i32>} : memref<8x128xf32, #tpu.memory_space<vmem>>, vector<8x128xf32>,
    } else {
    }
    %c2_i32_9 = arith.constant 2 : i32
    %15 = arith.cmpi eq, %arg0, %c2_i32_9 : i32
    %16 = arith.extui %15 : i1 to i32
    %c0_i32_10 = arith.constant 0 : i32
    %17 = arith.cmpi ne, %16, %c0_i32_10 : i32
    scf.if %17 {
      %c0_11 = arith.constant 0 : index
      %c0_12 = arith.constant 0 : index
      %18 = vector.load %arg4[%c0_11, %c0_12] : memref<8x128xf32, #tpu.memory_space<vmem>>, vector<8x128xf32>
      tpu.vector_store %arg4[%c0_11, %c0_12], %11 {strides = array<i32>} : memref<8x128xf32, #tpu.memory_space<vmem>>, vector<8x128xf32>,
    } else {
    }
    return
  }
  func.func @transform_0(%arg0: i32) -> (i32, i32) {
    %c0_i32 = arith.constant 0 : i32
    %c0_i32_0 = arith.constant 0 : i32
    %c0_i32_1 = arith.constant 0 : i32
    return %c0_i32, %c0_i32_0 : i32, i32
  }
  func.func @transform_1(%arg0: i32) -> (i32, i32, i32) {
    %c0_i32 = arith.constant 0 : i32
    %c0_i32_0 = arith.constant 0 : i32
    %c0_i32_1 = arith.constant 0 : i32
    return %arg0, %c0_i32, %c0_i32_0 : i32, i32, i32
  }
  func.func @transform_2(%arg0: i32) -> (i32, i32, i32) {
    %c0_i32 = arith.constant 0 : i32
    %c0_i32_0 = arith.constant 0 : i32
    %c0_i32_1 = arith.constant 0 : i32
    return %arg0, %c0_i32, %c0_i32_0 : i32, i32, i32
  }
  func.func @transform_3(%arg0: i32) -> (i32, i32) {
    %c0_i32 = arith.constant 0 : i32
    %c0_i32_0 = arith.constant 0 : i32
    %c0_i32_1 = arith.constant 0 : i32
    return %c0_i32, %c0_i32_0 : i32, i32
  }
}

</mosaic_0001>

<llo_original>
// kernel: tpu_custom_call.1
$region0: #{tpu_custom_call.1}
  #allocation0 [shape = 'u32[]', space=smem, size = 0x4, offset = 0x4, fixed_abs, tag = 'smem constant byte address 0x4 - core index']
  #allocation1 [shape = 'u32[144,128]{1,0:T(1,128)}', space=vmem, size = 0x12000, scoped, tag = 'internal scratch']
  #allocation2 [shape = 'f32[8,128]{1,0:T(8,128)}', space=vmem, size = 0x1000, scoped, tag = 'scratch operand']
  %s0 = inlined_call_operand.hbm [shape: f32[8,128], index: 0, kind: input, shape index: {}]
  %s1 = inlined_call_operand.hbm [shape: f32[3,128,128], index: 1, kind: input, shape index: {}]
  %s2 = inlined_call_operand.hbm [shape: f32[3,3,128], index: 2, kind: input, shape index: {}]
  %s3 = inlined_call_operand.hbm [shape: f32[8,128], index: 3, kind: output, shape index: {}]
  %s4 = sld [smem:[#allocation0]]
  $region69: #{tpu_custom_call.1} parent=0
    _
  %s6 = ssub.s32 1, %s4
  %s7 = scalar_select 0, %s6, %s4
  $region1: #{tpu_custom_call.1} parent=0
    #allocation3 [shape = 'u8[4096]{0}', space=vmem, size = 0x1000, scoped, tag = 'input window, operand 0, single buffered']
    #allocation4 [shape = 's32[2]{0}', space=sflag, size = 0x8, scoped, tag = 'scoped memory for tpu_custom_call.1']
    #allocation5 [shape = 's32[2]{0}', space=sflag, size = 0x8, scoped, tag = 'scoped memory for tpu_custom_call.1']
    #allocation6 [shape = 'u8[131072]{0}', space=vmem, size = 0x20000, scoped, tag = 'input window, operand 1']
    #allocation7 [shape = 's32[2]{0}', space=sflag, size = 0x8, scoped, tag = 'scoped memory for tpu_custom_call.1']
    #allocation8 [shape = 'u8[4096]{0}', space=vmem, size = 0x1000, scoped, tag = 'input window, operand 2']
    #allocation9 [shape = 'u8[4096]{0}', space=vmem, size = 0x1000, scoped, tag = 'output window, operand 0, single buffered']
    %8 = vsyncpa [#allocation4], 0
    %9 = vsyncpa [#allocation7], 0
    %s10 = scalar_lea.sflag [#allocation7], 1
    %11 = vsyncpa %s10, 0
    %12 = vsyncpa [#allocation5], 0
    loop: start=0, step=1, limit=5
    $region2: #{tpu_custom_call.1} parent=1 // loop_pre_header
      _
    $region3: #{tpu_custom_call.1} parent=1 // loop_header
      %s14 = sphi 0, %s18
      %p15 = scmp.ge.s32.totalorder %s14, 5
      %s22 = sphi 0, %s22
      %s24 = sphi 0, %s22
      %s25 = sphi 0, %s24
      %s39 = sphi 0, %s25
      %s45 = sphi 0, %s47
      %s48 = sphi 0, %s45
      %s49 = sphi 0, %s48
      %s65 = sphi 0, %s49
      %s71 = sphi 0, %s73
      %s74 = sphi 0, %s71
      %s75 = sphi 0, %s74
      %s91 = sphi 0, %s75
      %s95 = sphi 0, %s95
      %s97 = sphi 0, %s95
      %s98 = sphi 0, %s97
      %s112 = sphi 0, %s98
    $region4: #{tpu_custom_call.1} parent=1 // loop_header_branch
      %17 = sbr.rel (%p15) target = $region8
    $region5: #{tpu_custom_call.1} parent=1 // loop_body
      %s19 = ssub.s32 %s14, 1
      %s20 = ssub.s32 %s14, 2
      %s21 = sadd.s32 %s14, 1
      %s23 = sadd.s32 %s22, 1
      %p26 = scmp.eq.s32.totalorder %s14, 2
      %p27 = scmp.ne.s32.totalorder %s22, %s24
      %p28 = scmp.eq.s32.totalorder %s14, 0
      %p29 = por %p27, %p28
      %p30 = scmp.ne.s32.totalorder %s22, %s24
      %p31 = scmp.eq.s32.totalorder %s19, 2
      %p32 = por %p30, %p31
      %p33 = scmp.ne.s32.totalorder %s24, %s25
      %p34 = scmp.eq.s32.totalorder %s19, 0
      %p35 = por %p33, %p34
      %p36 = scmp.ne.s32.totalorder %s24, %s25
      %p37 = scmp.eq.s32.totalorder %s20, 2
      %p38 = por %p36, %p37
      %p40 = scmp.ne.s32.totalorder %s25, %s39
      %p41 = scmp.eq.s32.totalorder %s20, 0
      %p42 = por %p40, %p41
      %s43 = ssub.s32 %s14, %s21
      %p44 = scmp.eq.s32.totalorder %s43, 0
      %s46 = sadd.s32 %s45, 1
      %s47 = scalar_select %p44, %s45, %s46
      %p50 = pneg %p44
      %p51 = scmp.eq.s32.totalorder %s14, 2
      %p52 = por %p50, %p51
      %p53 = scmp.ne.s32.totalorder %s45, %s48
      %p54 = scmp.eq.s32.totalorder %s14, 0
      %p55 = por %p53, %p54
      %p56 = scmp.ne.s32.totalorder %s45, %s48
      %p57 = scmp.eq.s32.totalorder %s19, 2
      %p58 = por %p56, %p57
      %p59 = scmp.ne.s32.totalorder %s48, %s49
      %p60 = scmp.eq.s32.totalorder %s19, 0
      %p61 = por %p59, %p60
      %p62 = scmp.ne.s32.totalorder %s48, %s49
      %p63 = scmp.eq.s32.totalorder %s20, 2
      %p64 = por %p62, %p63
      %p66 = scmp.ne.s32.totalorder %s49, %s65
      %p67 = scmp.eq.s32.totalorder %s20, 0
      %p68 = por %p66, %p67
      %s69 = ssub.s32 %s14, %s21
      %p70 = scmp.eq.s32.totalorder %s69, 0
      %s72 = sadd.s32 %s71, 1
      %s73 = scalar_select %p70, %s71, %s72
      %p76 = pneg %p70
      %p77 = scmp.eq.s32.totalorder %s14, 2
      %p78 = por %p76, %p77
      %p79 = scmp.ne.s32.totalorder %s71, %s74
      %p80 = scmp.eq.s32.totalorder %s14, 0
      %p81 = por %p79, %p80
      %p82 = scmp.ne.s32.totalorder %s71, %s74
      %p83 = scmp.eq.s32.totalorder %s19, 2
      %p84 = por %p82, %p83
      %p85 = scmp.ne.s32.totalorder %s74, %s75
      %p86 = scmp.eq.s32.totalorder %s19, 0
      %p87 = por %p85, %p86
      %p88 = scmp.ne.s32.totalorder %s74, %s75
      %p89 = scmp.eq.s32.totalorder %s20, 2
      %p90 = por %p88, %p89
      %p92 = scmp.ne.s32.totalorder %s75, %s91
      %p93 = scmp.eq.s32.totalorder %s20, 0
      %p94 = por %p92, %p93
      %s96 = sadd.s32 %s95, 1
      %p99 = scmp.eq.s32.totalorder %s14, 2
      %p100 = scmp.ne.s32.totalorder %s95, %s97
      %p101 = scmp.eq.s32.totalorder %s14, 0
      %p102 = por %p100, %p101
      %p103 = scmp.ne.s32.totalorder %s95, %s97
      %p104 = scmp.eq.s32.totalorder %s19, 2
      %p105 = por %p103, %p104
      %p106 = scmp.ne.s32.totalorder %s97, %s98
      %p107 = scmp.eq.s32.totalorder %s19, 0
      %p108 = por %p106, %p107
      %p109 = scmp.ne.s32.totalorder %s97, %s98
      %p110 = scmp.eq.s32.totalorder %s20, 2
      %p111 = por %p109, %p110
      %p113 = scmp.ne.s32.totalorder %s98, %s112
      %p114 = scmp.eq.s32.totalorder %s20, 0
      %p115 = por %p113, %p114
      %p116 = scmp.le.s32.totalorder 1, %s14
      %p117 = scmp.lt.s32.totalorder %s14, 4
      %p118 = pnand %p116, %p117
      %p119 = pneg %p118
      // Predicated region
      $region9: #{tpu_custom_call.1} parent=5 // pred_check
        _
      $region10: #{tpu_custom_call.1} parent=5 // pred_check_branch
        %121 = sbr.rel (%p118) target = $region12
      $region11: #{tpu_custom_call.1} parent=5 // pred_region
        %s122 = ssub.s32 %s14, 1
        // Predicated region
        $region13: #{tpu_custom_call.1} parent=11 // pred_check
          %p123 = pneg %p35
        $region14: #{tpu_custom_call.1} parent=11 // pred_check_branch
          %125 = sbr.rel (%p123) target = $region16
        $region15: #{tpu_custom_call.1} parent=11 // pred_region
          %s127 = ssub.s32 128, 128
          %128 = vsyncadd [#allocation4], %s127
          %s130 = sshll.u32 [#allocation3], 4
          %s131 = int_to_ptr.vmem [resolvable:$true] %s130
          %133 = dma.hbm_to_vmem [thread:$0]  %s0, 128, %s131, [#allocation4]
        $region16: #{tpu_custom_call.1} parent=11 // pred_fallthru
          _
      $region12: #{tpu_custom_call.1} parent=5 // pred_fallthru
        _
      %p134 = scmp.lt.s32.totalorder %s14, 3
      // Predicated region
      $region17: #{tpu_custom_call.1} parent=5 // pred_check
        %p135 = pneg %p134
      $region18: #{tpu_custom_call.1} parent=5 // pred_check_branch
        %137 = sbr.rel (%p135) target = $region20
      $region19: #{tpu_custom_call.1} parent=5 // pred_region
        // Predicated region
        $region21: #{tpu_custom_call.1} parent=19 // pred_check
          %p138 = pneg %p55
        $region22: #{tpu_custom_call.1} parent=19 // pred_check_branch
          %140 = sbr.rel (%p138) target = $region24
        $region23: #{tpu_custom_call.1} parent=19 // pred_region
          %s141 = sand.u32 %s14, 1
          %s142 = scalar_lea.sflag [#allocation7], %s141
          %s143 = sand.u32 %s45, 1
          %s144 = smul.addr %s143, 128
          %s145 = scalar_lea.vmem [#allocation6], %s144
          %s147 = ssub.s32 2048, 2048
          %148 = vsyncadd %s142, %s147
          %s149 = smul.addr %s14, 16
          %s150 = smul.addr %s149, 128
          %s151 = scalar_lea.hbm %s1, %s150
          %s152 = sshll.u32 %s145, 4
          %s153 = int_to_ptr.vmem [resolvable:$true] %s152
          %158 = dma.hbm_to_vmem [thread:$0]  %s151, 2048, %s153, %s142, 128, 128, 8
        $region24: #{tpu_custom_call.1} parent=19 // pred_fallthru
          _
        // Predicated region
        $region25: #{tpu_custom_call.1} parent=19 // pred_check
          %p159 = pneg %p81
        $region26: #{tpu_custom_call.1} parent=19 // pred_check_branch
          %161 = sbr.rel (%p159) target = $region28
        $region27: #{tpu_custom_call.1} parent=19 // pred_region
          %s162 = sand.u32 %s14, 1
          %s163 = scalar_lea.sflag [#allocation7], %s162
          %s164 = sand.u32 %s71, 1
          %s165 = smul.addr %s164, 4
          %s166 = scalar_lea.vmem [#allocation8], %s165
          %s168 = ssub.s32 64, 64
          %169 = vsyncadd %s163, %s168
          %s170 = smul.addr %s14, 64
          %s171 = scalar_lea.hbm %s2, %s170
          %s173 = sshll.u32 %s166, 4
          %s174 = int_to_ptr.vmem [resolvable:$true] %s173
          %176 = dma.hbm_to_vmem [thread:$0]  %s171, 64, %s174, %s163
        $region28: #{tpu_custom_call.1} parent=19 // pred_fallthru
          _
      $region20: #{tpu_custom_call.1} parent=5 // pred_fallthru
        _
      %p177 = scmp.le.s32.totalorder 1, %s14
      %p178 = scmp.lt.s32.totalorder %s14, 4
      %p179 = pnand %p177, %p178
      %p180 = pneg %p179
      // Predicated region
      $region29: #{tpu_custom_call.1} parent=5 // pred_check
        _
      $region30: #{tpu_custom_call.1} parent=5 // pred_check_branch
        %182 = sbr.rel (%p179) target = $region32
      $region31: #{tpu_custom_call.1} parent=5 // pred_region
        %s183 = ssub.s32 %s14, 1
        // Predicated region
        $region33: #{tpu_custom_call.1} parent=31 // pred_check
          %p184 = pneg %p35
        $region34: #{tpu_custom_call.1} parent=31 // pred_check_branch
          %186 = sbr.rel (%p184) target = $region36
        $region35: #{tpu_custom_call.1} parent=31 // pred_region
          %187 = dma.done [#allocation4], 128
        $region36: #{tpu_custom_call.1} parent=31 // pred_fallthru
          _
        %s188 = sand.u32 %s19, 1
        %s189 = scalar_lea.sflag [#allocation7], %s188
        %s190 = sand.u32 %s48, 1
        %s191 = smul.addr %s190, 128
        %s192 = scalar_lea.vmem [#allocation6], %s191
        // Predicated region
        $region37: #{tpu_custom_call.1} parent=31 // pred_check
          %p193 = pneg %p61
        $region38: #{tpu_custom_call.1} parent=31 // pred_check_branch
          %195 = sbr.rel (%p193) target = $region40
        $region39: #{tpu_custom_call.1} parent=31 // pred_region
          %196 = dma.done %s189, 2048
        $region40: #{tpu_custom_call.1} parent=31 // pred_fallthru
          _
        %s197 = sand.u32 %s19, 1
        %s198 = scalar_lea.sflag [#allocation7], %s197
        %s199 = sand.u32 %s74, 1
        %s200 = smul.addr %s199, 4
        %s201 = scalar_lea.vmem [#allocation8], %s200
        // Predicated region
        $region41: #{tpu_custom_call.1} parent=31 // pred_check
          %p202 = pneg %p87
        $region42: #{tpu_custom_call.1} parent=31 // pred_check_branch
          %204 = sbr.rel (%p202) target = $region44
        $region43: #{tpu_custom_call.1} parent=31 // pred_region
          %205 = dma.done %s198, 64
        $region44: #{tpu_custom_call.1} parent=31 // pred_fallthru
          _
        %p206 = pneg %p35
        %p207 = pneg %p32
        %s208 = sand.u32 %s19, 1
        %s209 = scalar_lea.sflag [#allocation7], %s208
        %s210 = sand.u32 %s48, 1
        %s211 = smul.addr %s210, 128
        %s212 = scalar_lea.vmem [#allocation6], %s211
        %p213 = pneg %p61
        %p214 = pneg %p58
        %s215 = sand.u32 %s19, 1
        %s216 = scalar_lea.sflag [#allocation7], %s215
        %s217 = sand.u32 %s74, 1
        %s218 = smul.addr %s217, 4
        %s219 = scalar_lea.vmem [#allocation8], %s218
        %p220 = pneg %p87
        %p221 = pneg %p84
        %p222 = pneg %p108
        %p223 = pneg %p105
        %p224 = scmp.eq.s32.totalorder %s19, 0
        // Predicated region
        $region45: #{tpu_custom_call.1} parent=31 // pred_check
          %p225 = pneg %p224
        $region46: #{tpu_custom_call.1} parent=31 // pred_check_branch
          %227 = sbr.rel (%p225) target = $region48
        $region47: #{tpu_custom_call.1} parent=31 // pred_region
          %v228 = vld [vmem:[#allocation3] sm:$0xff]
          %229 = vst [vmem:[#allocation2] sm:$0xff] %v228
        $region48: #{tpu_custom_call.1} parent=31 // pred_fallthru
          _
        %v230 = vld [vmem:[%s192] sm:$0xff]
        %v231 = vld [vmem:[%s192 + $0x8] sm:$0xff]
        %v232 = vld [vmem:[%s192 + $0x10] sm:$0xff]
        %v233 = vld [vmem:[%s192 + $0x18] sm:$0xff]
        %v234 = vld [vmem:[%s192 + $0x20] sm:$0xff]
        %v235 = vld [vmem:[%s192 + $0x28] sm:$0xff]
        %v236 = vld [vmem:[%s192 + $0x30] sm:$0xff]
        %v237 = vld [vmem:[%s192 + $0x38] sm:$0xff]
        %v238 = vld [vmem:[%s192 + $0x40] sm:$0xff]
        %v239 = vld [vmem:[%s192 + $0x48] sm:$0xff]
        %v240 = vld [vmem:[%s192 + $0x50] sm:$0xff]
        %v241 = vld [vmem:[%s192 + $0x58] sm:$0xff]
        %v242 = vld [vmem:[%s192 + $0x60] sm:$0xff]
        %v243 = vld [vmem:[%s192 + $0x68] sm:$0xff]
        %v244 = vld [vmem:[%s192 + $0x70] sm:$0xff]
        %v245 = vld [vmem:[%s192 + $0x78] sm:$0xff]
        %v246 = vld [vmem:[%s201] sm:$0x7]
        %v247 = vld [vmem:[#allocation2] sm:$0xff]
        %v248 = vlaneseq
        %v249 = vshrl.u32 %v248, 7
        %v250 = vsub.s32 0, %v249
        %v251 = vrot.slane %v246, %v250
        %252 = vmatprep.subr.mxu0 0.0
        %253 = vmatpush1.msra.mxu0 %v245
        %254 = vmatprep.subr.mxu0 0.0
        %255 = vmatpush1.msra.mxu0 %v244
        %256 = vmatprep.subr.mxu0 0.0
        %257 = vmatpush1.msra.mxu0 %v243
        %258 = vmatprep.subr.mxu0 0.0
        %259 = vmatpush1.msra.mxu0 %v242
        %260 = vmatprep.subr.mxu0 0.0
        %261 = vmatpush1.msra.mxu0 %v241
        %262 = vmatprep.subr.mxu0 0.0
        %263 = vmatpush1.msra.mxu0 %v240
        %264 = vmatprep.subr.mxu0 0.0
        %265 = vmatpush1.msra.mxu0 %v239
        %266 = vmatprep.subr.mxu0 0.0
        %267 = vmatpush1.msra.mxu0 %v238
        %268 = vmatprep.subr.mxu0 0.0
        %269 = vmatpush1.msra.mxu0 %v237
        %270 = vmatprep.subr.mxu0 0.0
        %271 = vmatpush1.msra.mxu0 %v236
        %272 = vmatprep.subr.mxu0 0.0
        %273 = vmatpush1.msra.mxu0 %v235
        %274 = vmatprep.subr.mxu0 0.0
        %275 = vmatpush1.msra.mxu0 %v234
        %276 = vmatprep.subr.mxu0 0.0
        %277 = vmatpush1.msra.mxu0 %v233
        %278 = vmatprep.subr.mxu0 0.0
        %279 = vmatpush1.msra.mxu0 %v232
        %280 = vmatprep.subr.mxu0 0.0
        %281 = vmatpush1.msra.mxu0 %v231
        %282 = vmatprep.subr.mxu0 0.0
        %283 = vmatpush1.msra.mxu0 %v230
        %284 = vmatprep.subr.mxu0 0.0
        %285 = vmatpush2.msra.mxu0 0.0
        %286 = vmatprep.subr.mxu0 0.0
        %287 = vmatpush2.msra.mxu0 0.0
        %288 = vmatprep.subr.mxu0 0.0
        %289 = vmatpush2.msra.mxu0 0.0
        %290 = vmatprep.subr.mxu0 0.0
        %291 = vmatpush2.msra.mxu0 0.0
        %292 = vmatprep.subr.mxu0 0.0
        %293 = vmatpush2.msra.mxu0 0.0
        %294 = vmatprep.subr.mxu0 0.0
        %295 = vmatpush2.msra.mxu0 0.0
        %296 = vmatprep.subr.mxu0 0.0
        %297 = vmatpush2.msra.mxu0 0.0
        %298 = vmatprep.subr.mxu0 0.0
        %299 = vmatpush2.msra.mxu0 0.0
        %300 = vmatprep.subr.mxu0 0.0
        %301 = vmatpush2.msra.mxu0 0.0
        %302 = vmatprep.subr.mxu0 0.0
        %303 = vmatpush2.msra.mxu0 0.0
        %304 = vmatprep.subr.mxu0 0.0
        %305 = vmatpush2.msra.mxu0 0.0
        %306 = vmatprep.subr.mxu0 0.0
        %307 = vmatpush2.msra.mxu0 0.0
        %308 = vmatprep.subr.mxu0 0.0
        %309 = vmatpush2.msra.mxu0 0.0
        %310 = vmatprep.subr.mxu0 0.0
        %311 = vmatpush2.msra.mxu0 0.0
        %312 = vmatprep.subr.mxu0 0.0
        %313 = vmatpush2.msra.mxu0 0.0
        %314 = vmatprep.subr.mxu0 0.0
        %315 = vmatpush2.msra.mxu0 0.0
        %316 = vmatprep.mubr.f32.mxu0 0.0
        %317 = vmatmul.mubr.f32.gmra.mxu0 %v247
        %v318 = vpop.f32.mrf.mxu0
        %v319 = vadd.f32 %v251, %v318
        %v320 = vpop.f32.mrf.mxu0
        %321 = vdwg.mxu0
        %p322 = scmp.lt.s32.totalorder %s19, 2
        // Predicated region
        $region49: #{tpu_custom_call.1} parent=31 // pred_check
          %p323 = pneg %p322
        $region50: #{tpu_custom_call.1} parent=31 // pred_check_branch
          %325 = sbr.rel (%p323) target = $region52
        $region51: #{tpu_custom_call.1} parent=31 // pred_region
          %v326 = vrot.slane %v319, 4
          %v327 = vadd.f32 %v319, %v326
          %v328 = vrot.slane %v327, 2
          %v329 = vadd.f32 %v327, %v328
          %v330 = vrot.slane %v329, 1
          %v331 = vadd.f32 %v329, %v330
          %v332 = vmul.f32 %v319, %v319
          %v333 = vrot.slane %v332, 4
          %v334 = vadd.f32 %v332, %v333
          %v335 = vrot.slane %v334, 2
          %v336 = vadd.f32 %v334, %v335
          %v337 = vrot.slane %v336, 1
          %v338 = vadd.f32 %v336, %v337
          %v339 = vmul.f32 %v331, 0.125
          %v340 = vmul.f32 %v338, 0.125
          %v341 = vmul.f32 %v339, %v339
          %v342 = vsub.f32 %v340, %v341
          %v343 = vmax.f32 %v342, 0.0
          %v344 = vsub.f32 %v319, %v339
          %v345 = vadd.f32 %v343, 1e-05
          %v346 = vrsqrt.pop %v345
          %v347 = vmul.f32 %v344, %v346
          %v348 = vlaneseq
          %v349 = vshrl.u32 %v348, 7
          %v350 = vsub.s32 1, %v349
          %v351 = vrot.slane %v246, %v350
          %v352 = vmul.f32 %v347, %v351
          %v353 = vlaneseq
          %v354 = vshrl.u32 %v353, 7
          %v355 = vsub.s32 2, %v354
          %v356 = vrot.slane %v246, %v355
          %v357 = vadd.f32 %v352, %v356
          %v358 = vmax.f32 %v357, 0.0
          %359 = vst [vmem:[#allocation2] sm:$0xff] %v358
        $region52: #{tpu_custom_call.1} parent=31 // pred_fallthru
          _
        %p360 = scmp.eq.s32.totalorder %s19, 2
        // Predicated region
        $region53: #{tpu_custom_call.1} parent=31 // pred_check
          %p361 = pneg %p360
        $region54: #{tpu_custom_call.1} parent=31 // pred_check_branch
          %363 = sbr.rel (%p361) target = $region56
        $region55: #{tpu_custom_call.1} parent=31 // pred_region
          %364 = vst [vmem:[#allocation9] sm:$0xff] %v319
        $region56: #{tpu_custom_call.1} parent=31 // pred_fallthru
          _
        // Predicated region
        $region57: #{tpu_custom_call.1} parent=31 // pred_check
          %p365 = pneg %p105
        $region58: #{tpu_custom_call.1} parent=31 // pred_check_branch
          %367 = sbr.rel (%p365) target = $region60
        $region59: #{tpu_custom_call.1} parent=31 // pred_region
          %s369 = ssub.s32 128, 128
          %370 = vsyncadd [#allocation5], %s369
          %s372 = sshll.u32 [#allocation9], 4
          %s373 = int_to_ptr.vmem [resolvable:$true] %s372
          %375 = dma.vmem_to_hbm [thread:$0]  %s373, 128, %s3, [#allocation5]
        $region60: #{tpu_custom_call.1} parent=31 // pred_fallthru
          _
        // Predicated region
        $region61: #{tpu_custom_call.1} parent=31 // pred_check
          %p376 = pneg %p105
        $region62: #{tpu_custom_call.1} parent=31 // pred_check_branch
          %378 = sbr.rel (%p376) target = $region64
        $region63: #{tpu_custom_call.1} parent=31 // pred_region
          %379 = dma.done [#allocation5], 128
        $region64: #{tpu_custom_call.1} parent=31 // pred_fallthru
          _
      $region32: #{tpu_custom_call.1} parent=5 // pred_fallthru
        _
      %p380 = scmp.le.s32.totalorder 2, %s14
      // Predicated region
      $region65: #{tpu_custom_call.1} parent=5 // pred_check
        %p381 = pneg %p380
      $region66: #{tpu_custom_call.1} parent=5 // pred_check_branch
        %383 = sbr.rel (%p381) target = $region68
      $region67: #{tpu_custom_call.1} parent=5 // pred_region
        %s384 = ssub.s32 %s14, 2
      $region68: #{tpu_custom_call.1} parent=5 // pred_fallthru
        _
    $region6: #{tpu_custom_call.1} parent=1 // loop_footer
      %s18 = sadd.s32 1, %s14
    $region7: #{tpu_custom_call.1} parent=1 // loop_footer_branch
      %13 = sbr.rel target = $region3
    $region8: #{tpu_custom_call.1} parent=1 // loop_exit
      _
    %385 = vsyncpa [#allocation4], 1
    %s386 = scalar_lea.sflag [#allocation4], 1
    %387 = vsyncpa %s386, 1
    %388 = vsyncpa [#allocation7], 1
    %s389 = scalar_lea.sflag [#allocation7], 1
    %390 = vsyncpa %s389, 1
    %391 = vsyncpa [#allocation5], 1
    %s392 = scalar_lea.sflag [#allocation5], 1
    %393 = vsyncpa %s392, 1

</llo_original>
